<compile_context>
chip_gen: v5e
topology: v5e:2x2
jax: 0.10.0
libtpu: 0.0.40
codegen_flags: <defaults>
</compile_context>

<pallas_src>
import jax
import jax.numpy as jnp
from jax.experimental import pallas as pl
from jax.experimental.pallas import tpu as pltpu

INPUT_DIM = 8        # len(features)
HIDDEN_DIM = 50
NUM_LAYERS = 2
OUTPUT_DIM = 1

GATE_SLAB = 128      # each live gate (i, g, o) occupies one 128-lane slab
N_GATES = 3          # i, g, o  (f pruned: it multiplies c0 == 0)
H_PAD = 128          # hidden carried lane-padded; lanes 50..127 are exact zeros
OUT_PAD = 128        # lane-dense output tile; real scalar lives in column 0
DEFAULT_TILE_B = 256


def _round_up(n, m):
    return ((n + m - 1) // m) * m


def _lstm_fc_kernel(x_ref, w1_ref, b1_ref, w2_ref, b2_ref, wfc_ref, bfc_ref,
                    out_ref):
    G = GATE_SLAB
    x = x_ref[...]                                                  # (B, 8)

    # ---- LSTM layer 1 (single step, h0 = c0 = 0) ----
    g1 = jnp.dot(x, w1_ref[...],
                 preferred_element_type=jnp.float32) + b1_ref[...]  # (B, 384)
    i1 = jax.nn.sigmoid(g1[:, 0:G])          # 128-aligned slices -> free views
    c1 = i1 * jnp.tanh(g1[:, G:2 * G])
    h1 = jax.nn.sigmoid(g1[:, 2 * G:3 * G]) * jnp.tanh(c1)          # (B, 128)

    # ---- LSTM layer 2 (input = h1, h0 = c0 = 0) ----
    g2 = jnp.dot(h1, w2_ref[...],
                 preferred_element_type=jnp.float32) + b2_ref[...]  # (B, 384)
    i2 = jax.nn.sigmoid(g2[:, 0:G])
    c2 = i2 * jnp.tanh(g2[:, G:2 * G])
    h2 = jax.nn.sigmoid(g2[:, 2 * G:3 * G]) * jnp.tanh(c2)          # (B, 128)

    # ---- Final linear, lane-dense (B, 128) store; column 0 is the output ----
    out_ref[...] = jnp.dot(h2, wfc_ref[...],
                           preferred_element_type=jnp.float32) + bfc_ref[...]


def pack_params(params):
    """Pack PyTorch-layout params into lane-aligned, f-gate-pruned operands."""
    H = HIDDEN_DIM

    def pack_gates(w_ih, b_ih, b_hh, k_pad):
        # w_ih: (4H, K) in PyTorch order [i, f, g, o]; keep i, g, o only.
        K = w_ih.shape[1]
        w_t = jnp.zeros((k_pad, N_GATES * GATE_SLAB), jnp.float32)
        b = jnp.zeros((1, N_GATES * GATE_SLAB), jnp.float32)
        bias = b_ih + b_hh                   # W_hh @ h0 == 0; biases still count
        for slab, lo in enumerate((0 * H, 2 * H, 3 * H)):        # i, g, o rows
            col = slab * GATE_SLAB
            w_t = w_t.at[:K, col:col + H].set(w_ih[lo:lo + H, :].T)
            b = b.at[0, col:col + H].set(bias[lo:lo + H])
        return w_t, b

    w1, b1 = pack_gates(params["w_ih_l0"], params["b_ih_l0"],
                        params["b_hh_l0"], INPUT_DIM)            # (8, 384), (1, 384)
    w2, b2 = pack_gates(params["w_ih_l1"], params["b_ih_l1"],
                        params["b_hh_l1"], H_PAD)                # (128, 384), (1, 384)

    wfc = jnp.zeros((H_PAD, OUT_PAD), jnp.float32)
    wfc = wfc.at[:H, :OUTPUT_DIM].set(params["w_fc"].T)          # (128, 128)
    bfc = jnp.zeros((1, OUT_PAD), jnp.float32)
    bfc = bfc.at[0, :OUTPUT_DIM].set(params["b_fc"])             # (1, 128)
    return w1, b1, w2, b2, wfc, bfc


def lstm_model_forward_packed(x, packed, *, tile_b=DEFAULT_TILE_B):
    """x: (B, INPUT_DIM) float32. packed: output of pack_params.
    Returns (B, OUTPUT_DIM) float32."""
    B = x.shape[0]
    w1, b1, w2, b2, wfc, bfc = packed
    vmem = pltpu.MemorySpace.VMEM

    if B <= tile_b:
        # Single shot: no grid -> no degenerate 1-step pipeline, no weight
        # double-buffering.  Pad batch only to the 8-row sublane granule.
        bp = _round_up(B, 8)
        xp = jnp.pad(x, ((0, bp - B), (0, 0))) if bp != B else x
        out = pl.pallas_call(
            _lstm_fc_kernel,
            out_shape=jax.ShapeDtypeStruct((bp, OUT_PAD), jnp.float32),
            in_specs=[pl.BlockSpec(memory_space=vmem)] * 7,
            out_specs=pl.BlockSpec(memory_space=vmem),
        )(xp, w1, b1, w2, b2, wfc, bfc)
        return out[:B, :OUTPUT_DIM]

    # Large batch: tile the batch over one "parallel" grid axis (megacore /
    # v7x second TensorCore).  Weights use constant block indices, so Pallas
    # keeps them resident and does not re-DMA them per step.
    bp = _round_up(B, tile_b)
    xp = jnp.pad(x, ((0, bp - B), (0, 0))) if bp != B else x
    grid = (bp // tile_b,)
    out = pl.pallas_call(
        _lstm_fc_kernel,
        out_shape=jax.ShapeDtypeStruct((bp, OUT_PAD), jnp.float32),
        grid=grid,
        in_specs=[
            pl.BlockSpec((tile_b, INPUT_DIM), lambda i: (i, 0)),
            pl.BlockSpec(w1.shape, lambda i: (0, 0)),
            pl.BlockSpec(b1.shape, lambda i: (0, 0)),
            pl.BlockSpec(w2.shape, lambda i: (0, 0)),
            pl.BlockSpec(b2.shape, lambda i: (0, 0)),
            pl.BlockSpec(wfc.shape, lambda i: (0, 0)),
            pl.BlockSpec(bfc.shape, lambda i: (0, 0)),
        ],
        out_specs=pl.BlockSpec((tile_b, OUT_PAD), lambda i: (i, 0)),
        compiler_params=pltpu.CompilerParams(
            dimension_semantics=("parallel",)),
    )(xp, w1, b1, w2, b2, wfc, bfc)
    return out[:B, :OUTPUT_DIM]


def lstm_model_forward(x, params, *, tile_b=DEFAULT_TILE_B):
    """Convenience wrapper: packs the raw PyTorch-layout params then runs."""
    return lstm_model_forward_packed(x, pack_params(params), tile_b=tile_b)


def _reference_forward(x, params):
    """Pure-JAX reference mirroring PyTorch nn.LSTM (seq_len=1) + nn.Linear."""
    H = HIDDEN_DIM

    def cell(inp, w_ih, w_hh, b_ih, b_hh):
        h0 = jnp.zeros((inp.shape[0], H), jnp.float32)
        c0 = jnp.zeros((inp.shape[0], H), jnp.float32)
        gates = inp @ w_ih.T + b_ih + h0 @ w_hh.T + b_hh
        i = jax.nn.sigmoid(gates[:, 0 * H:1 * H])
        f = jax.nn.sigmoid(gates[:, 1 * H:2 * H])
        g = jnp.tanh(gates[:, 2 * H:3 * H])
        o = jax.nn.sigmoid(gates[:, 3 * H:4 * H])
        c = f * c0 + i * g
        return o * jnp.tanh(c)

    h1 = cell(x, params["w_ih_l0"], params["w_hh_l0"],
              params["b_ih_l0"], params["b_hh_l0"])
    h2 = cell(h1, params["w_ih_l1"], params["w_hh_l1"],
              params["b_ih_l1"], params["b_hh_l1"])
    return h2 @ params["w_fc"].T + params["b_fc"]


def init_params(key):
    """Deterministic init matching PyTorch shapes (uniform +-1/sqrt(H))."""
    bound = 1.0 / jnp.sqrt(jnp.float32(HIDDEN_DIM))
    names_shapes = [
        ("w_ih_l0", (4 * HIDDEN_DIM, INPUT_DIM)),
        ("w_hh_l0", (4 * HIDDEN_DIM, HIDDEN_DIM)),
        ("b_ih_l0", (4 * HIDDEN_DIM,)),
        ("b_hh_l0", (4 * HIDDEN_DIM,)),
        ("w_ih_l1", (4 * HIDDEN_DIM, HIDDEN_DIM)),
        ("w_hh_l1", (4 * HIDDEN_DIM, HIDDEN_DIM)),
        ("b_ih_l1", (4 * HIDDEN_DIM,)),
        ("b_hh_l1", (4 * HIDDEN_DIM,)),
        ("w_fc", (OUTPUT_DIM, HIDDEN_DIM)),
        ("b_fc", (OUTPUT_DIM,)),
    ]
    params = {}
    for name, shape in names_shapes:
        key, sub = jax.random.split(key)
        params[name] = jax.random.uniform(sub, shape, jnp.float32,
                                          minval=-bound, maxval=bound)
    return params


if __name__ == "__main__":
    key = jax.random.PRNGKey(0)
    key, kx1, kx2 = jax.random.split(key, 3)
    params = init_params(key)
    packed = pack_params(params)     # pack once; reuse across calls

    # Small batch -> single-shot (no-grid) path.
    B_small = 8
    x_small = jax.random.normal(kx1, (B_small, INPUT_DIM), jnp.float32)
    out_small = jax.block_until_ready(
        lstm_model_forward_packed(x_small, packed))
    ref_small = _reference_forward(x_small, params)
    assert out_small.shape == (B_small, OUTPUT_DIM)
    assert jnp.allclose(out_small, ref_small, atol=1e-5, rtol=1e-5)

    # Larger (ragged) batch -> batch-tiled "parallel" grid path.
    B_big = 200
    x_big = jax.random.normal(kx2, (B_big, INPUT_DIM), jnp.float32)
    out_big = jax.block_until_ready(
        lstm_model_forward_packed(x_big, packed, tile_b=128))
    ref_big = _reference_forward(x_big, params)
    assert out_big.shape == (B_big, OUTPUT_DIM)
    assert jnp.allclose(out_big, ref_big, atol=1e-5, rtol=1e-5)

    print("KERNEL_OK")
</pallas_src>

<mosaic_0001>
module attributes {stable_mosaic.version = 11 : i64} {
  func.func @_lstm_fc_kernel(%arg0: memref<8x8xf32, #tpu.memory_space<vmem>>, %arg1: memref<8x384xf32, #tpu.memory_space<vmem>>, %arg2: memref<1x384xf32, #tpu.memory_space<vmem>>, %arg3: memref<128x384xf32, #tpu.memory_space<vmem>>, %arg4: memref<1x384xf32, #tpu.memory_space<vmem>>, %arg5: memref<128x128xf32, #tpu.memory_space<vmem>>, %arg6: memref<1x128xf32, #tpu.memory_space<vmem>>, %arg7: memref<8x128xf32, #tpu.memory_space<vmem>>) attributes {dimension_semantics = [], scalar_prefetch = 0 : i64, scratch_operands = 0 : i64, tpu.core_type = #tpu.core_type<tc>} {
    %c0 = arith.constant 0 : index
    %c0_0 = arith.constant 0 : index
    %0 = vector.load %arg0[%c0, %c0_0] : memref<8x8xf32, #tpu.memory_space<vmem>>, vector<8x8xf32>
    %c0_1 = arith.constant 0 : index
    %c0_2 = arith.constant 0 : index
    %1 = vector.load %arg1[%c0_1, %c0_2] : memref<8x384xf32, #tpu.memory_space<vmem>>, vector<8x384xf32>
    %cst = arith.constant dense<0.000000e+00> : vector<8x384xf32>
    %2 = tpu.matmul %0, %1, %cst {dimension_numbers = #tpu.dot_dimension_numbers<[1], [0], [0], [1], [0, 0, 1, 1], [], []>} : vector<8x8xf32>, vector<8x384xf32>, vector<8x384xf32> -> vector<8x384xf32>
    %c0_3 = arith.constant 0 : index
    %c0_4 = arith.constant 0 : index
    %3 = vector.load %arg2[%c0_3, %c0_4] : memref<1x384xf32, #tpu.memory_space<vmem>>, vector<1x384xf32>
    %4 = vector.broadcast %3 : vector<1x384xf32> to vector<8x384xf32>
    %5 = arith.addf %2, %4 : vector<8x384xf32>
    %6 = vector.extract_strided_slice %5 {offsets = [0, 0], sizes = [8, 128], strides = [1, 1]} : vector<8x384xf32> to vector<8x128xf32>
    %7 = arith.negf %6 : vector<8x128xf32>
    %8 = math.exp %7 : vector<8x128xf32>
    %cst_5 = arith.constant 1.000000e+00 : f32
    %9 = vector.broadcast %cst_5 : f32 to vector<8x128xf32>
    %10 = arith.addf %9, %8 : vector<8x128xf32>
    %11 = arith.divf %9, %10 : vector<8x128xf32>
    %12 = vector.extract_strided_slice %5 {offsets = [0, 128], sizes = [8, 128], strides = [1, 1]} : vector<8x384xf32> to vector<8x128xf32>
    %13 = math.tanh %12 : vector<8x128xf32>
    %14 = arith.mulf %11, %13 : vector<8x128xf32>
    %15 = vector.extract_strided_slice %5 {offsets = [0, 256], sizes = [8, 128], strides = [1, 1]} : vector<8x384xf32> to vector<8x128xf32>
    %16 = arith.negf %15 : vector<8x128xf32>
    %17 = math.exp %16 : vector<8x128xf32>
    %cst_6 = arith.constant 1.000000e+00 : f32
    %18 = vector.broadcast %cst_6 : f32 to vector<8x128xf32>
    %19 = arith.addf %18, %17 : vector<8x128xf32>
    %20 = arith.divf %18, %19 : vector<8x128xf32>
    %21 = math.tanh %14 : vector<8x128xf32>
    %22 = arith.mulf %20, %21 : vector<8x128xf32>
    %c0_7 = arith.constant 0 : index
    %c0_8 = arith.constant 0 : index
    %23 = vector.load %arg3[%c0_7, %c0_8] : memref<128x384xf32, #tpu.memory_space<vmem>>, vector<128x384xf32>
    %cst_9 = arith.constant dense<0.000000e+00> : vector<8x384xf32>
    %24 = tpu.matmul %22, %23, %cst_9 {dimension_numbers = #tpu.dot_dimension_numbers<[1], [0], [0], [1], [0, 0, 1, 1], [], []>} : vector<8x128xf32>, vector<128x384xf32>, vector<8x384xf32> -> vector<8x384xf32>
    %c0_10 = arith.constant 0 : index
    %c0_11 = arith.constant 0 : index
    %25 = vector.load %arg4[%c0_10, %c0_11] : memref<1x384xf32, #tpu.memory_space<vmem>>, vector<1x384xf32>
    %26 = vector.broadcast %25 : vector<1x384xf32> to vector<8x384xf32>
    %27 = arith.addf %24, %26 : vector<8x384xf32>
    %28 = vector.extract_strided_slice %27 {offsets = [0, 0], sizes = [8, 128], strides = [1, 1]} : vector<8x384xf32> to vector<8x128xf32>
    %29 = arith.negf %28 : vector<8x128xf32>
    %30 = math.exp %29 : vector<8x128xf32>
    %cst_12 = arith.constant 1.000000e+00 : f32
    %31 = vector.broadcast %cst_12 : f32 to vector<8x128xf32>
    %32 = arith.addf %31, %30 : vector<8x128xf32>
    %33 = arith.divf %31, %32 : vector<8x128xf32>
    %34 = vector.extract_strided_slice %27 {offsets = [0, 128], sizes = [8, 128], strides = [1, 1]} : vector<8x384xf32> to vector<8x128xf32>
    %35 = math.tanh %34 : vector<8x128xf32>
    %36 = arith.mulf %33, %35 : vector<8x128xf32>
    %37 = vector.extract_strided_slice %27 {offsets = [0, 256], sizes = [8, 128], strides = [1, 1]} : vector<8x384xf32> to vector<8x128xf32>
    %38 = arith.negf %37 : vector<8x128xf32>
    %39 = math.exp %38 : vector<8x128xf32>
    %cst_13 = arith.constant 1.000000e+00 : f32
    %40 = vector.broadcast %cst_13 : f32 to vector<8x128xf32>
    %41 = arith.addf %40, %39 : vector<8x128xf32>
    %42 = arith.divf %40, %41 : vector<8x128xf32>
    %43 = math.tanh %36 : vector<8x128xf32>
    %44 = arith.mulf %42, %43 : vector<8x128xf32>
    %c0_14 = arith.constant 0 : index
    %c0_15 = arith.constant 0 : index
    %45 = vector.load %arg5[%c0_14, %c0_15] : memref<128x128xf32, #tpu.memory_space<vmem>>, vector<128x128xf32>
    %cst_16 = arith.constant dense<0.000000e+00> : vector<8x128xf32>
    %46 = tpu.matmul %44, %45, %cst_16 {dimension_numbers = #tpu.dot_dimension_numbers<[1], [0], [0], [1], [0, 0, 1, 1], [], []>} : vector<8x128xf32>, vector<128x128xf32>, vector<8x128xf32> -> vector<8x128xf32>
    %c0_17 = arith.constant 0 : index
    %c0_18 = arith.constant 0 : index
    %47 = vector.load %arg6[%c0_17, %c0_18] : memref<1x128xf32, #tpu.memory_space<vmem>>, vector<1x128xf32>
    %48 = vector.broadcast %47 : vector<1x128xf32> to vector<8x128xf32>
    %49 = arith.addf %46, %48 : vector<8x128xf32>
    %c0_19 = arith.constant 0 : index
    %c0_20 = arith.constant 0 : index
    %50 = vector.load %arg7[%c0_19, %c0_20] : memref<8x128xf32, #tpu.memory_space<vmem>>, vector<8x128xf32>
    tpu.vector_store %arg7[%c0_19, %c0_20], %49 {strides = array<i32>} : memref<8x128xf32, #tpu.memory_space<vmem>>, vector<8x128xf32>,
    return
  }
}

</mosaic_0001>

<llo_original>
// kernel: tpu_custom_call.1
$region0: #{tpu_custom_call.1}
  #allocation0 [shape = 'u32[]', space=smem, size = 0x4, offset = 0x4, fixed_abs, tag = 'smem constant byte address 0x4 - core index']
  #allocation1 [shape = 'u32[72,128]{1,0:T(1,128)}', space=vmem, size = 0x9000, scoped, tag = 'internal scratch']
  %s0 = inlined_call_operand.hbm [shape: f32[8,8], index: 0, kind: input, shape index: {}]
  %s1 = inlined_call_operand.hbm [shape: f32[8,384], index: 1, kind: input, shape index: {}]
  %s2 = inlined_call_operand.hbm [shape: f32[1,384], index: 2, kind: input, shape index: {}]
  %s3 = inlined_call_operand.hbm [shape: f32[128,384], index: 3, kind: input, shape index: {}]
  %s4 = inlined_call_operand.vmem [shape: f32[1,384], index: 4, kind: input, shape index: {}]
  %s5 = inlined_call_operand.hbm [shape: f32[128,128], index: 5, kind: input, shape index: {}]
  %s6 = inlined_call_operand.vmem [shape: f32[1,128], index: 6, kind: input, shape index: {}]
  %s7 = inlined_call_operand.hbm [shape: f32[8,128], index: 7, kind: output, shape index: {}]
  %s8 = sld [smem:[#allocation0]]
  $region58: #{tpu_custom_call.1} parent=0
    _
  %s10 = ssub.s32 1, %s8
  %s11 = scalar_select 0, %s10, %s8
  $region1: #{tpu_custom_call.1} parent=0
    #allocation2 [shape = 'u8[4096]{0}', space=vmem, size = 0x1000, scoped, tag = 'input window, operand 0, single buffered']
    #allocation3 [shape = 's32[1]{0}', space=sflag, size = 0x4, scoped, tag = 'scoped memory for tpu_custom_call.1']
    #allocation4 [shape = 's32[1]{0}', space=sflag, size = 0x4, scoped, tag = 'scoped memory for tpu_custom_call.1']
    #allocation5 [shape = 'u8[12288]{0}', space=vmem, size = 0x3000, scoped, tag = 'input window, operand 1, single buffered']
    #allocation6 [shape = 's32[1]{0}', space=sflag, size = 0x4, scoped, tag = 'scoped memory for tpu_custom_call.1']
    #allocation7 [shape = 'u8[1536]{0}', space=vmem, size = 0x800, scoped, tag = 'input window, operand 2, single buffered']
    #allocation8 [shape = 'u8[196608]{0}', space=vmem, size = 0x30000, scoped, tag = 'input window, operand 3, single buffered']
    #allocation9 [shape = 's32[1]{0}', space=sflag, size = 0x4, scoped, tag = 'scoped memory for tpu_custom_call.1']
    #allocation10 [shape = 'u8[65536]{0}', space=vmem, size = 0x10000, scoped, tag = 'input window, operand 5, single buffered']
    #allocation11 [shape = 'u8[4096]{0}', space=vmem, size = 0x1000, scoped, tag = 'output window, operand 0, single buffered']
    %12 = vsyncpa [#allocation3], 0
    %13 = vsyncpa [#allocation6], 0
    %14 = vsyncpa [#allocation9], 0
    %15 = vsyncpa [#allocation4], 0
    // Predicated region
    $region2: #{tpu_custom_call.1} parent=1 // pred_check
      _
    $region3: #{tpu_custom_call.1} parent=1 // pred_check_branch
      %17 = sbr.rel (0) target = $region5
    $region4: #{tpu_custom_call.1} parent=1 // pred_region
      %19 = vsyncadd [#allocation3], 0
      %s21 = sshll.u32 %s0, 4
      %s22 = int_to_ptr.hbm [resolvable:$true] %s21
      %s23 = sshll.u32 [#allocation2], 4
      %s24 = int_to_ptr.vmem [resolvable:$true] %s23
      %26 = dma.hbm_to_vmem [thread:$0]  %s22, 128, %s24, [#allocation3]
    $region5: #{tpu_custom_call.1} parent=1 // pred_fallthru
      _
    // Predicated region
    $region6: #{tpu_custom_call.1} parent=1 // pred_check
      _
    $region7: #{tpu_custom_call.1} parent=1 // pred_check_branch
      %28 = sbr.rel (0) target = $region9
    $region8: #{tpu_custom_call.1} parent=1 // pred_region
      %30 = vsyncadd [#allocation6], 0
      %s32 = sshll.u32 %s1, 4
      %s33 = int_to_ptr.hbm [resolvable:$true] %s32
      %s34 = sshll.u32 [#allocation5], 4
      %s35 = int_to_ptr.vmem [resolvable:$true] %s34
      %37 = dma.hbm_to_vmem [thread:$0]  %s33, 384, %s35, [#allocation6]
    $region9: #{tpu_custom_call.1} parent=1 // pred_fallthru
      _
    // Predicated region
    $region10: #{tpu_custom_call.1} parent=1 // pred_check
      _
    $region11: #{tpu_custom_call.1} parent=1 // pred_check_branch
      %39 = sbr.rel (0) target = $region13
    $region12: #{tpu_custom_call.1} parent=1 // pred_region
      %41 = vsyncadd [#allocation6], 0
      %s43 = sshll.u32 %s2, 4
      %s44 = int_to_ptr.hbm [resolvable:$true] %s43
      %s45 = sshll.u32 [#allocation7], 4
      %s46 = int_to_ptr.vmem [resolvable:$true] %s45
      %48 = dma.hbm_to_vmem [thread:$0]  %s44, 48, %s46, [#allocation6]
    $region13: #{tpu_custom_call.1} parent=1 // pred_fallthru
      _
    // Predicated region
    $region14: #{tpu_custom_call.1} parent=1 // pred_check
      _
    $region15: #{tpu_custom_call.1} parent=1 // pred_check_branch
      %50 = sbr.rel (0) target = $region17
    $region16: #{tpu_custom_call.1} parent=1 // pred_region
      %52 = vsyncadd [#allocation9], 0
      %s53 = sshll.u32 %s3, 4
      %s54 = int_to_ptr.hbm [resolvable:$true] %s53
      %s55 = sshll.u32 [#allocation8], 4
      %s56 = int_to_ptr.vmem [resolvable:$true] %s55
      %61 = dma.hbm_to_vmem [thread:$0]  %s54, 6144, %s56, [#allocation9], 384, 384, 24
    $region17: #{tpu_custom_call.1} parent=1 // pred_fallthru
      _
    // Predicated region
    $region18: #{tpu_custom_call.1} parent=1 // pred_check
      _
    $region19: #{tpu_custom_call.1} parent=1 // pred_check_branch
      %63 = sbr.rel (0) target = $region21
    $region20: #{tpu_custom_call.1} parent=1 // pred_region
      _
    $region21: #{tpu_custom_call.1} parent=1 // pred_fallthru
      _
    // Predicated region
    $region22: #{tpu_custom_call.1} parent=1 // pred_check
      _
    $region23: #{tpu_custom_call.1} parent=1 // pred_check_branch
      %65 = sbr.rel (0) target = $region25
    $region24: #{tpu_custom_call.1} parent=1 // pred_region
      %67 = vsyncadd [#allocation9], 0
      %s68 = sshll.u32 %s5, 4
      %s69 = int_to_ptr.hbm [resolvable:$true] %s68
      %s70 = sshll.u32 [#allocation10], 4
      %s71 = int_to_ptr.vmem [resolvable:$true] %s70
      %76 = dma.hbm_to_vmem [thread:$0]  %s69, 2048, %s71, [#allocation9], 128, 128, 8
    $region25: #{tpu_custom_call.1} parent=1 // pred_fallthru
      _
    // Predicated region
    $region26: #{tpu_custom_call.1} parent=1 // pred_check
      _
    $region27: #{tpu_custom_call.1} parent=1 // pred_check_branch
      %78 = sbr.rel (0) target = $region29
    $region28: #{tpu_custom_call.1} parent=1 // pred_region
      _
    $region29: #{tpu_custom_call.1} parent=1 // pred_fallthru
      _
    // Predicated region
    $region30: #{tpu_custom_call.1} parent=1 // pred_check
      _
    $region31: #{tpu_custom_call.1} parent=1 // pred_check_branch
      %80 = sbr.rel (0) target = $region33
    $region32: #{tpu_custom_call.1} parent=1 // pred_region
      %82 = dma.done [#allocation3], 128
    $region33: #{tpu_custom_call.1} parent=1 // pred_fallthru
      _
    // Predicated region
    $region34: #{tpu_custom_call.1} parent=1 // pred_check
      _
    $region35: #{tpu_custom_call.1} parent=1 // pred_check_branch
      %84 = sbr.rel (0) target = $region37
    $region36: #{tpu_custom_call.1} parent=1 // pred_region
      %86 = dma.done [#allocation6], 384
    $region37: #{tpu_custom_call.1} parent=1 // pred_fallthru
      _
    // Predicated region
    $region38: #{tpu_custom_call.1} parent=1 // pred_check
      _
    $region39: #{tpu_custom_call.1} parent=1 // pred_check_branch
      %88 = sbr.rel (0) target = $region41
    $region40: #{tpu_custom_call.1} parent=1 // pred_region
      %90 = dma.done [#allocation6], 48
    $region41: #{tpu_custom_call.1} parent=1 // pred_fallthru
      _
    // Predicated region
    $region42: #{tpu_custom_call.1} parent=1 // pred_check
      _
    $region43: #{tpu_custom_call.1} parent=1 // pred_check_branch
      %92 = sbr.rel (0) target = $region45
    $region44: #{tpu_custom_call.1} parent=1 // pred_region
      %94 = dma.done [#allocation9], 6144
    $region45: #{tpu_custom_call.1} parent=1 // pred_fallthru
      _
    // Predicated region
    $region46: #{tpu_custom_call.1} parent=1 // pred_check
      _
    $region47: #{tpu_custom_call.1} parent=1 // pred_check_branch
      %96 = sbr.rel (0) target = $region49
    $region48: #{tpu_custom_call.1} parent=1 // pred_region
      %98 = dma.done [#allocation9], 2048
    $region49: #{tpu_custom_call.1} parent=1 // pred_fallthru
      _
    %v99 = vld [vmem:[#allocation2] sm:$0xff]
    %v100 = vld [vmem:[#allocation5] sm:$0xff]
    %v101 = vld [vmem:[#allocation5 + $0x8] sm:$0xff]
    %v102 = vld [vmem:[#allocation5 + $0x10] sm:$0xff]
    %v103 = vld [vmem:[#allocation7] sm:$0x7]
    %v105 = vperm.slane %v103, 0
    %v106 = vperm.slane %v103, 1
    %v107 = vperm.slane %v103, 2
    %vm111 = vcmask 64512
    %v113 = vsel %vm111, %v99, 0
    %115 = vmatpush.msra.mxu0 0.0
    %116 = vmatpush.msra.mxu0 0.0
    %117 = vmatpush.msra.mxu0 0.0
    %118 = vmatpush.msra.mxu0 0.0
    %119 = vmatpush.msra.mxu0 0.0
    %120 = vmatpush.msra.mxu0 0.0
    %121 = vmatpush.msra.mxu0 0.0
    %122 = vmatpush.msra.mxu0 0.0
    %123 = vmatpush.msra.mxu0 0.0
    %124 = vmatpush.msra.mxu0 0.0
    %125 = vmatpush.msra.mxu0 0.0
    %126 = vmatpush.msra.mxu0 0.0
    %127 = vmatpush.msra.mxu0 0.0
    %128 = vmatpush.msra.mxu0 0.0
    %129 = vmatpush.msra.mxu0 0.0
    %130 = vmatpush.msra.mxu0 %v100
    %131 = vmatmul.f32.gmra.mxu0 %v113
    %v132 = vpop.f32.mrf.mxu0
    %v133 = vadd.f32 %v105, %v132
    %134 = vdwg.mxu0
    %135 = vmatpush.msra.mxu0 0.0
    %136 = vmatpush.msra.mxu0 0.0
    %137 = vmatpush.msra.mxu0 0.0
    %138 = vmatpush.msra.mxu0 0.0
    %139 = vmatpush.msra.mxu0 0.0
    %140 = vmatpush.msra.mxu0 0.0
    %141 = vmatpush.msra.mxu0 0.0
    %142 = vmatpush.msra.mxu0 0.0
    %143 = vmatpush.msra.mxu0 0.0
    %144 = vmatpush.msra.mxu0 0.0
    %145 = vmatpush.msra.mxu0 0.0
    %146 = vmatpush.msra.mxu0 0.0
    %147 = vmatpush.msra.mxu0 0.0
    %148 = vmatpush.msra.mxu0 0.0
    %149 = vmatpush.msra.mxu0 0.0
    %150 = vmatpush.msra.mxu0 %v101
    %151 = vmatmul.f32.gmra.mxu0 %v113
    %v152 = vpop.f32.mrf.mxu0
    %v153 = vadd.f32 %v106, %v152
    %154 = vdwg.mxu0
    %155 = vmatpush.msra.mxu0 0.0
    %156 = vmatpush.msra.mxu0 0.0
    %157 = vmatpush.msra.mxu0 0.0
    %158 = vmatpush.msra.mxu0 0.0
    %159 = vmatpush.msra.mxu0 0.0
    %160 = vmatpush.msra.mxu0 0.0
    %161 = vmatpush.msra.mxu0 0.0
    %162 = vmatpush.msra.mxu0 0.0
    %163 = vmatpush.msra.mxu0 0.0
    %164 = vmatpush.msra.mxu0 0.0
    %165 = vmatpush.msra.mxu0 0.0
    %166 = vmatpush.msra.mxu0 0.0
    %167 = vmatpush.msra.mxu0 0.0
    %168 = vmatpush.msra.mxu0 0.0
    %169 = vmatpush.msra.mxu0 0.0
    %170 = vmatpush.msra.mxu0 %v102
    %171 = vmatmul.f32.gmra.mxu0 %v113
    %v172 = vpop.f32.mrf.mxu0
    %v173 = vadd.f32 %v107, %v172
    %174 = vdwg.mxu0
    %v175 = vxor.u32 %v133, 2147483648
    %v176 = vmul.f32 %v175, 1.442695
    %v177 = vpow.pop %v176
    %v178 = vadd.f32 %v177, 1.0
    %v179 = vrcp.pop %v178
    %v180 = vmul.f32 %v178, %v179
    %v181 = vsub.f32 1.0, %v180
    %v182 = vmul.f32 %v179, %v181
    %v183 = vadd.f32 %v179, %v182
    %vm184 = vweird.f32 %v178
    %vm185 = vweird.f32 %v179
    %vm186 = vmor %vm184, %vm185
    %v187 = vsel %vm186, %v179, %v183
    %v188 = vand.u32 2147483647, %v178
    %vm189 = vcmp.eq.f32.partialorder %v188, 8.507059e+37
    %v190 = vand.u32 %v178, 2147483648
    %v191 = vor.u32 1.1754944e-38, %v190
    %v192 = vsel %vm189, %v191, %v187
    %v193 = vmul.f32 1.0, %v192
    %v194 = vtanh.pop %v153
    %v195 = vmul.f32 %v193, %v194
    %v196 = vxor.u32 %v173, 2147483648
    %v197 = vmul.f32 %v196, 1.442695
    %v198 = vpow.pop %v197
    %v199 = vadd.f32 %v198, 1.0
    %v200 = vrcp.pop %v199
    %v201 = vmul.f32 %v199, %v200
    %v202 = vsub.f32 1.0, %v201
    %v203 = vmul.f32 %v200, %v202
    %v204 = vadd.f32 %v200, %v203
    %vm205 = vweird.f32 %v199
    %vm206 = vweird.f32 %v200
    %vm207 = vmor %vm205, %vm206
    %v208 = vsel %vm207, %v200, %v204
    %v209 = vand.u32 2147483647, %v199
    %vm210 = vcmp.eq.f32.partialorder %v209, 8.507059e+37
    %v211 = vand.u32 %v199, 2147483648
    %v212 = vor.u32 1.1754944e-38, %v211
    %v213 = vsel %vm210, %v212, %v208
    %v214 = vmul.f32 1.0, %v213
    %v215 = vtanh.pop %v195
    %v216 = vmul.f32 %v214, %v215
    %v217 = vld [vmem:[#allocation8] sm:$0xff]
    %v218 = vld [vmem:[#allocation8 + $0x8] sm:$0xff]
    %v219 = vld [vmem:[#allocation8 + $0x10] sm:$0xff]
    %v220 = vld [vmem:[#allocation8 + $0x18] sm:$0xff]
    %v221 = vld [vmem:[#allocation8 + $0x20] sm:$0xff]
    %v222 = vld [vmem:[#allocation8 + $0x28] sm:$0xff]
    %v223 = vld [vmem:[#allocation8 + $0x30] sm:$0xff]
    %v224 = vld [vmem:[#allocation8 + $0x38] sm:$0xff]
    %v225 = vld [vmem:[#allocation8 + $0x40] sm:$0xff]
    %v226 = vld [vmem:[#allocation8 + $0x48] sm:$0xff]
    %v227 = vld [vmem:[#allocation8 + $0x50] sm:$0xff]
    %v228 = vld [vmem:[#allocation8 + $0x58] sm:$0xff]
    %v229 = vld [vmem:[#allocation8 + $0x60] sm:$0xff]
    %v230 = vld [vmem:[#allocation8 + $0x68] sm:$0xff]
    %v231 = vld [vmem:[#allocation8 + $0x70] sm:$0xff]
    %v232 = vld [vmem:[#allocation8 + $0x78] sm:$0xff]
    %v233 = vld [vmem:[#allocation8 + $0x80] sm:$0xff]
    %v234 = vld [vmem:[#allocation8 + $0x88] sm:$0xff]
    %v235 = vld [vmem:[#allocation8 + $0x90] sm:$0xff]
    %v236 = vld [vmem:[#allocation8 + $0x98] sm:$0xff]
    %v237 = vld [vmem:[#allocation8 + $0xa0] sm:$0xff]
    %v238 = vld [vmem:[#allocation8 + $0xa8] sm:$0xff]
    %v239 = vld [vmem:[#allocation8 + $0xb0] sm:$0xff]
    %v240 = vld [vmem:[#allocation8 + $0xb8] sm:$0xff]
    %v241 = vld [vmem:[#allocation8 + $0xc0] sm:$0xff]
    %v242 = vld [vmem:[#allocation8 + $0xc8] sm:$0xff]
    %v243 = vld [vmem:[#allocation8 + $0xd0] sm:$0xff]
    %v244 = vld [vmem:[#allocation8 + $0xd8] sm:$0xff]
    %v245 = vld [vmem:[#allocation8 + $0xe0] sm:$0xff]
    %v246 = vld [vmem:[#allocation8 + $0xe8] sm:$0xff]
    %v247 = vld [vmem:[#allocation8 + $0xf0] sm:$0xff]
    %v248 = vld [vmem:[#allocation8 + $0xf8] sm:$0xff]
    %v249 = vld [vmem:[#allocation8 + $0x100] sm:$0xff]
    %v250 = vld [vmem:[#allocation8 + $0x108] sm:$0xff]
    %v251 = vld [vmem:[#allocation8 + $0x110] sm:$0xff]
    %v252 = vld [vmem:[#allocation8 + $0x118] sm:$0xff]
    %v253 = vld [vmem:[#allocation8 + $0x120] sm:$0xff]
    %v254 = vld [vmem:[#allocation8 + $0x128] sm:$0xff]
    %v255 = vld [vmem:[#allocation8 + $0x130] sm:$0xff]
    %v256 = vld [vmem:[#allocation8 + $0x138] sm:$0xff]
    %v257 = vld [vmem:[#allocation8 + $0x140] sm:$0xff]
    %v258 = vld [vmem:[#allocation8 + $0x148] sm:$0xff]
    %v259 = vld [vmem:[#allocation8 + $0x150] sm:$0xff]
    %v260 = vld [vmem:[#allocation8 + $0x158] sm:$0xff]
    %v261 = vld [vmem:[#allocation8 + $0x160] sm:$0xff]
    %v262 = vld [vmem:[#allocation8 + $0x168] sm:$0xff]
    %v263 = vld [vmem:[#allocation8 + $0x170] sm:$0xff]
    %v264 = vld [vmem:[#allocation8 + $0x178] sm:$0xff]
    %v265 = vld [vmem:[%s4] sm:$0x7]
    %v267 = vperm.slane %v265, 0
    %v268 = vperm.slane %v265, 1
    %v269 = vperm.slane %v265, 2
    %273 = vmatpush.msra.mxu0 %v262
    %274 = vmatpush.msra.mxu0 %v259
    %275 = vmatpush.msra.mxu0 %v256
    %276 = vmatpush.msra.mxu0 %v253
    %277 = vmatpush.msra.mxu0 %v250
    %278 = vmatpush.msra.mxu0 %v247
    %279 = vmatpush.msra.mxu0 %v244
    %280 = vmatpush.msra.mxu0 %v241
    %281 = vmatpush.msra.mxu0 %v238
    %282 = vmatpush.msra.mxu0 %v235
    %283 = vmatpush.msra.mxu0 %v232
    %284 = vmatpush.msra.mxu0 %v229
    %285 = vmatpush.msra.mxu0 %v226
    %286 = vmatpush.msra.mxu0 %v223
    %287 = vmatpush.msra.mxu0 %v220
    %288 = vmatpush.msra.mxu0 %v217
    %289 = vmatmul.f32.gmra.mxu0 %v216
    %v290 = vpop.f32.mrf.mxu0
    %v291 = vadd.f32 %v267, %v290
    %292 = vdwg.mxu0
    %293 = vmatpush.msra.mxu0 %v263
    %294 = vmatpush.msra.mxu0 %v260
    %295 = vmatpush.msra.mxu0 %v257
    %296 = vmatpush.msra.mxu0 %v254
    %297 = vmatpush.msra.mxu0 %v251
    %298 = vmatpush.msra.mxu0 %v248
    %299 = vmatpush.msra.mxu0 %v245
    %300 = vmatpush.msra.mxu0 %v242
    %301 = vmatpush.msra.mxu0 %v239
    %302 = vmatpush.msra.mxu0 %v236
    %303 = vmatpush.msra.mxu0 %v233
    %304 = vmatpush.msra.mxu0 %v230
    %305 = vmatpush.msra.mxu0 %v227
    %306 = vmatpush.msra.mxu0 %v224
    %307 = vmatpush.msra.mxu0 %v221
    %308 = vmatpush.msra.mxu0 %v218
    %309 = vmatmul.f32.gmra.mxu0 %v216
    %v310 = vpop.f32.mrf.mxu0
    %v311 = vadd.f32 %v268, %v310
    %312 = vdwg.mxu0
    %313 = vmatpush.msra.mxu0 %v264
    %314 = vmatpush.msra.mxu0 %v261
    %315 = vmatpush.msra.mxu0 %v258
    %316 = vmatpush.msra.mxu0 %v255
    %317 = vmatpush.msra.mxu0 %v252
    %318 = vmatpush.msra.mxu0 %v249
    %319 = vmatpush.msra.mxu0 %v246
    %320 = vmatpush.msra.mxu0 %v243
    %321 = vmatpush.msra.mxu0 %v240
    %322 = vmatpush.msra.mxu0 %v237
    %323 = vmatpush.msra.mxu0 %v234
    %324 = vmatpush.msra.mxu0 %v231
    %325 = vmatpush.msra.mxu0 %v228
    %326 = vmatpush.msra.mxu0 %v225
    %327 = vmatpush.msra.mxu0 %v222
    %328 = vmatpush.msra.mxu0 %v219
    %329 = vmatmul.f32.gmra.mxu0 %v216
    %v330 = vpop.f32.mrf.mxu0
    %v331 = vadd.f32 %v269, %v330
    %332 = vdwg.mxu0
    %v333 = vxor.u32 %v291, 2147483648
    %v334 = vmul.f32 %v333, 1.442695
    %v335 = vpow.pop %v334
    %v336 = vadd.f32 %v335, 1.0
    %v337 = vrcp.pop %v336
    %v338 = vmul.f32 %v336, %v337
    %v339 = vsub.f32 1.0, %v338
    %v340 = vmul.f32 %v337, %v339
    %v341 = vadd.f32 %v337, %v340
    %vm342 = vweird.f32 %v336
    %vm343 = vweird.f32 %v337
    %vm344 = vmor %vm342, %vm343
    %v345 = vsel %vm344, %v337, %v341
    %v346 = vand.u32 2147483647, %v336
    %vm347 = vcmp.eq.f32.partialorder %v346, 8.507059e+37
    %v348 = vand.u32 %v336, 2147483648
    %v349 = vor.u32 1.1754944e-38, %v348
    %v350 = vsel %vm347, %v349, %v345
    %v351 = vmul.f32 1.0, %v350
    %v352 = vtanh.pop %v311
    %v353 = vmul.f32 %v351, %v352
    %v354 = vxor.u32 %v331, 2147483648
    %v355 = vmul.f32 %v354, 1.442695
    %v356 = vpow.pop %v355
    %v357 = vadd.f32 %v356, 1.0
    %v358 = vrcp.pop %v357
    %v359 = vmul.f32 %v357, %v358
    %v360 = vsub.f32 1.0, %v359
    %v361 = vmul.f32 %v358, %v360
    %v362 = vadd.f32 %v358, %v361
    %vm363 = vweird.f32 %v357
    %vm364 = vweird.f32 %v358
    %vm365 = vmor %vm363, %vm364
    %v366 = vsel %vm365, %v358, %v362
    %v367 = vand.u32 2147483647, %v357
    %vm368 = vcmp.eq.f32.partialorder %v367, 8.507059e+37
    %v369 = vand.u32 %v357, 2147483648
    %v370 = vor.u32 1.1754944e-38, %v369
    %v371 = vsel %vm368, %v370, %v366
    %v372 = vmul.f32 1.0, %v371
    %v373 = vtanh.pop %v353
    %v374 = vmul.f32 %v372, %v373
    %v375 = vld [vmem:[#allocation10] sm:$0xff]
    %v376 = vld [vmem:[#allocation10 + $0x8] sm:$0xff]
    %v377 = vld [vmem:[#allocation10 + $0x10] sm:$0xff]
    %v378 = vld [vmem:[#allocation10 + $0x18] sm:$0xff]
    %v379 = vld [vmem:[#allocation10 + $0x20] sm:$0xff]
    %v380 = vld [vmem:[#allocation10 + $0x28] sm:$0xff]
    %v381 = vld [vmem:[#allocation10 + $0x30] sm:$0xff]
    %v382 = vld [vmem:[#allocation10 + $0x38] sm:$0xff]
    %v383 = vld [vmem:[#allocation10 + $0x40] sm:$0xff]
    %v384 = vld [vmem:[#allocation10 + $0x48] sm:$0xff]
    %v385 = vld [vmem:[#allocation10 + $0x50] sm:$0xff]
    %v386 = vld [vmem:[#allocation10 + $0x58] sm:$0xff]
    %v387 = vld [vmem:[#allocation10 + $0x60] sm:$0xff]
    %v388 = vld [vmem:[#allocation10 + $0x68] sm:$0xff]
    %v389 = vld [vmem:[#allocation10 + $0x70] sm:$0xff]
    %v390 = vld [vmem:[#allocation10 + $0x78] sm:$0xff]
    %v391 = vld [vmem:[%s6] sm:$0x1]
    %v393 = vperm.slane %v391, 0
    %395 = vmatpush.msra.mxu0 %v390
    %396 = vmatpush.msra.mxu0 %v389
    %397 = vmatpush.msra.mxu0 %v388
    %398 = vmatpush.msra.mxu0 %v387
    %399 = vmatpush.msra.mxu0 %v386
    %400 = vmatpush.msra.mxu0 %v385
    %401 = vmatpush.msra.mxu0 %v384
    %402 = vmatpush.msra.mxu0 %v383
    %403 = vmatpush.msra.mxu0 %v382
    %404 = vmatpush.msra.mxu0 %v381
    %405 = vmatpush.msra.mxu0 %v380
    %406 = vmatpush.msra.mxu0 %v379
    %407 = vmatpush.msra.mxu0 %v378
    %408 = vmatpush.msra.mxu0 %v377
    %409 = vmatpush.msra.mxu0 %v376
    %410 = vmatpush.msra.mxu0 %v375
    %411 = vmatmul.f32.gmra.mxu0 %v374
    %v412 = vpop.f32.mrf.mxu0
    %v413 = vadd.f32 %v393, %v412
    %414 = vdwg.mxu0
    %415 = vst [vmem:[#allocation11] sm:$0xff] %v413
    // Predicated region
    $region50: #{tpu_custom_call.1} parent=1 // pred_check
      _
    $region51: #{tpu_custom_call.1} parent=1 // pred_check_branch
      %417 = sbr.rel (0) target = $region53
    $region52: #{tpu_custom_call.1} parent=1 // pred_region
      %419 = vsyncadd [#allocation4], 0
      %s421 = sshll.u32 [#allocation11], 4
      %s422 = int_to_ptr.vmem [resolvable:$true] %s421
      %s423 = sshll.u32 %s7, 4
      %s424 = int_to_ptr.hbm [resolvable:$true] %s423
      %426 = dma.vmem_to_hbm [thread:$0]  %s422, 128, %s424, [#allocation4]
    $region53: #{tpu_custom_call.1} parent=1 // pred_fallthru
      _
    // Predicated region
    $region54: #{tpu_custom_call.1} parent=1 // pred_check
      _
    $region55: #{tpu_custom_call.1} parent=1 // pred_check_branch
      %428 = sbr.rel (0) target = $region57
    $region56: #{tpu_custom_call.1} parent=1 // pred_region
      %430 = dma.done [#allocation4], 128
    $region57: #{tpu_custom_call.1} parent=1 // pred_fallthru
      _
    %431 = vsyncpa [#allocation3], 1
    %432 = vsyncpa [#allocation6], 1
    %433 = vsyncpa [#allocation9], 1
    %434 = vsyncpa [#allocation4], 1

</llo_original>
